<compile_context>
chip_gen: v7x
topology: tpu7x:2x2x1
jax: 0.10.0
libtpu: 0.0.40
codegen_flags: <defaults>
</compile_context>

<pallas_src>
import jax
import jax.numpy as jnp
from jax.experimental import pallas as pl
from jax.experimental.pallas import tpu as pltpu

LANES = 128
_DEFAULT_BLOCK_ROWS = 4096   # 128-lane rows per input block (~2 MiB f32)


def _cdiv(a, b):
    return -(-a // b)


def _round_up(x, m):
    return _cdiv(x, m) * m


def _choose_tiles(b, units, align, max_rows):
    """Pick (bb, t, nd).

    bb    : samples per block (multiple of 8, or == b, so output blocks are legal)
    t     : reduction-axis units per tile (multiple of `align`)
    nd    : number of tiles along the reduction axis (t spread evenly, so the
            last tile is nearly full -> minimal masked/garbage compute)
    Budget: max(bb, 8) * t <= max_rows  (sublane padding for bb < 8 included).
    """
    units_a = _round_up(units, align)
    if b * units_a <= max_rows:
        bb = b                                    # whole batch in one block
    elif b <= 8:
        bb = b
    elif units_a >= max(1, max_rows // 8):
        bb = 8                                    # long samples: tile the reduction axis
    else:
        bb = min(b, ((max_rows // units_a) // 8) * 8)   # short samples: pack many per block
        bb = max(bb, 8)
    t_max = max(align, ((max_rows // max(bb, 8)) // align) * align)
    nd0 = _cdiv(units, t_max)
    t = _round_up(_cdiv(units, nd0), align)
    nd = _cdiv(units, t)
    return bb, t, nd


def _plan(b, d, max_rows):
    """Decide layout (3-D vs 2-D view), block sizes, grid and masking needs."""
    rows = d // LANES
    use_3d = (d % LANES == 0) and (rows >= 8 or rows >= b)
    if use_3d:
        bb, t, nd = _choose_tiles(b, rows, 8, max_rows)
        limit = rows               # mask limit along the row (sublane) axis
        block_span = t
        need_mask = (rows % t) != 0
    else:
        cols = _cdiv(d, LANES)
        bb, t, nd = _choose_tiles(b, cols, 1, max_rows)
        limit = d                  # mask limit along the element (lane) axis
        block_span = t * LANES
        need_mask = (d % (t * LANES)) != 0
    nb = _cdiv(b, bb)
    # Extra "parallel" split of the reduction axis only when it costs nothing
    # (single batch step, even tile count) -- feeds v7x's 2nd TC, neutral elsewhere.
    n_split = 2 if (nb == 1 and nd >= 2 and nd % 2 == 0) else 1
    nd_ps = nd // n_split
    return use_3d, bb, t, nb, n_split, nd_ps, need_mask, limit, block_span


def _make_kernel(*, weighted, need_mask, nd_ps, block_span, limit, keep_lanes):
    """Build the kernel body.  Static configuration is closed over."""

    def kernel(*refs):
        if weighted:
            gt_ref, pred_ref, w_ref, s_out, w_out = refs
        else:
            gt_ref, pred_ref, s_out = refs

        j = pl.program_id(2)

        @pl.when(j == 0)
        def _init():
            s_out[...] = jnp.zeros_like(s_out)
            if weighted:
                w_out[...] = jnp.zeros_like(w_out)

        gt = gt_ref[...].astype(jnp.float32)
        pred = pred_ref[...].astype(jnp.float32)
        diff = gt - pred
        sq = diff * diff / gt                    # exact divide, matches reference
        if weighted:
            w = w_ref[...].astype(jnp.float32)
            sq = sq * w

        if need_mask:
            # Zero out the out-of-bounds tail (garbage from partial boundary
            # blocks).  jnp.where does not propagate NaN/Inf from the unselected
            # branch, so masking after computing sq is safe.
            p = pl.program_id(1)
            start = (p * nd_ps + j) * block_span
            idx = start + jax.lax.broadcasted_iota(jnp.int32, sq.shape, 1)
            valid = idx < limit
            sq = jnp.where(valid, sq, 0.0)
            if weighted:
                w = jnp.where(valid, w, 0.0)

        if keep_lanes:
            # 3-D path: (bb, t, 128) -> per-sample (bb, 128) lane slab.
            s_out[...] += jnp.sum(sq, axis=1)
            if weighted:
                w_out[...] += jnp.sum(w, axis=1)
        else:
            # 2-D path: (bb, t*128) -> per-sample (bb, 1) column.
            s_out[...] += jnp.sum(sq, axis=1, keepdims=True)
            if weighted:
                w_out[...] += jnp.sum(w, axis=1, keepdims=True)

    return kernel


def sqrel(gt, pred, weights=None, mask=None, *, max_block_rows=_DEFAULT_BLOCK_ROWS):
    """SqRel metric. gt/pred/(weights) are (B, ...); returns a float32 scalar."""
    if mask is not None:
        # TODO(synk): boolean-mask fancy indexing changes rank; not supported.
        raise NotImplementedError("mask is not supported in the Pallas SqRel kernel")

    b = int(gt.shape[0])
    d = 1
    for s in gt.shape[1:]:
        d *= int(s)
    d = max(d, 1)

    (use_3d, bb, t, nb, n_split, nd_ps,
     need_mask, limit, block_span) = _plan(b, d, max_block_rows)
    weighted = weights is not None

    if use_3d:
        rows = d // LANES
        gt_in = gt.reshape(b, rows, LANES)
        pred_in = pred.reshape(b, rows, LANES)
        w_in = weights.reshape(b, rows, LANES) if weighted else None
        in_spec = pl.BlockSpec((bb, t, LANES), lambda i, p, j: (i, p * nd_ps + j, 0))
        out_lanes = LANES
        keep_lanes = True
    else:
        gt_in = gt.reshape(b, d)
        pred_in = pred.reshape(b, d)
        w_in = weights.reshape(b, d) if weighted else None
        tile_d = t * LANES
        in_spec = pl.BlockSpec((bb, tile_d), lambda i, p, j: (i, p * nd_ps + j))
        out_lanes = 1
        keep_lanes = False

    out_spec = pl.BlockSpec((None, bb, out_lanes), lambda i, p, j: (p, i, 0))
    out_sds = jax.ShapeDtypeStruct((n_split, b, out_lanes), jnp.float32)
    grid = (nb, n_split, nd_ps)
    cparams = pltpu.CompilerParams(
        dimension_semantics=("parallel", "parallel", "arbitrary"),
        vmem_limit_bytes=48 * 1024 * 1024,
    )

    kernel = _make_kernel(weighted=weighted, need_mask=need_mask, nd_ps=nd_ps,
                          block_span=block_span, limit=limit, keep_lanes=keep_lanes)

    if not weighted:
        partial = pl.pallas_call(
            kernel,
            out_shape=out_sds,
            grid_spec=pltpu.PrefetchScalarGridSpec(
                num_scalar_prefetch=0,
                grid=grid,
                in_specs=[in_spec, in_spec],
                out_specs=out_spec,
            ),
            compiler_params=cparams,
        )(gt_in, pred_in)
        per_sample = jnp.sum(partial, axis=(0, 2)) / jnp.float32(d)
        return jnp.mean(per_sample)

    s_part, w_part = pl.pallas_call(
        kernel,
        out_shape=(out_sds, out_sds),
        grid_spec=pltpu.PrefetchScalarGridSpec(
            num_scalar_prefetch=0,
            grid=grid,
            in_specs=[in_spec, in_spec, in_spec],
            out_specs=(out_spec, out_spec),
        ),
        compiler_params=cparams,
    )(gt_in, pred_in, w_in)
    num = jnp.sum(s_part, axis=(0, 2))
    den = jnp.sum(w_part, axis=(0, 2))
    return jnp.mean(num / den)


def _sqrel_ref(gt, pred, weights=None):
    sq = (gt - pred) ** 2 / gt
    axes = tuple(range(1, gt.ndim))
    if weights is None:
        return jnp.mean(jnp.mean(sq, axis=axes))
    sq = sq * weights
    return jnp.mean(jnp.sum(sq, axis=axes) / jnp.sum(weights, axis=axes))


if __name__ == "__main__":
    key = jax.random.PRNGKey(0)

    def _check(shape, max_block_rows=_DEFAULT_BLOCK_ROWS):
        k1, k2, k3 = jax.random.split(jax.random.fold_in(key, sum(shape)), 3)
        # gt must be strictly positive (division by gt); keep it away from zero.
        gt = jax.random.uniform(k1, shape, jnp.float32, minval=0.5, maxval=2.0)
        pred = gt + 0.1 * jax.random.normal(k2, shape, jnp.float32)
        w = jax.random.uniform(k3, shape, jnp.float32, minval=0.1, maxval=1.0)

        out_u = jax.block_until_ready(sqrel(gt, pred, max_block_rows=max_block_rows))
        out_w = jax.block_until_ready(sqrel(gt, pred, w, max_block_rows=max_block_rows))
        ref_u = _sqrel_ref(gt, pred)
        ref_w = _sqrel_ref(gt, pred, w)
        assert jnp.allclose(out_u, ref_u, rtol=1e-4, atol=1e-6), (shape, out_u, ref_u)
        assert jnp.allclose(out_w, ref_w, rtol=1e-4, atol=1e-6), (shape, out_w, ref_w)

    # Default block size: lane-aligned (3-D path) and ragged (2-D path).
    _check((2, 4, 16, 16))    # D = 1024, rows = 8  -> 3-D path, no masking
    _check((2, 3, 15, 17))    # D = 765            -> 2-D path, tail mask
    # Tiny forced block sizes to exercise multi-tile accumulation, the
    # reduction-axis split, masking and ragged batch blocking on small data.
    _check((2, 9, 16, 16), max_block_rows=8)    # 3-D, nd=3 accumulation + row mask
    _check((10, 4, 16, 16), max_block_rows=8)   # 3-D, batch blocking with ragged batch
    _check((2, 3, 15, 17), max_block_rows=2)    # 2-D, split=2, nd_ps=3, element mask
    print("KERNEL_OK")
</pallas_src>

<mosaic_0001>
module attributes {stable_mosaic.version = 11 : i64} {
  func.func @kernel(%arg0: i32, %arg1: i32, %arg2: i32, %arg3: memref<2x8x128xf32, #tpu.memory_space<vmem>>, %arg4: memref<2x8x128xf32, #tpu.memory_space<vmem>>, %arg5: memref<1x2x128xf32, #tpu.memory_space<vmem>>) attributes {dimension_semantics = [#tpu.dimension_semantics<parallel>, #tpu.dimension_semantics<parallel>, #tpu.dimension_semantics<arbitrary>], iteration_bounds = array<i64: 1, 1, 1>, scalar_prefetch = 0 : i64, scratch_operands = 0 : i64, tpu.core_type = #tpu.core_type<tc>, window_params = [{transform_indices = @transform_0, window_bounds = array<i64: 2, 8, 128>}, {transform_indices = @transform_1, window_bounds = array<i64: 2, 8, 128>}, {transform_indices = @transform_2, window_bounds = array<i64: 1, 2, 128>}]} {
    %c0_i32 = arith.constant 0 : i32
    %0 = arith.cmpi eq, %arg2, %c0_i32 : i32
    %1 = arith.extui %0 : i1 to i32
    %c0_i32_0 = arith.constant 0 : i32
    %2 = arith.cmpi ne, %1, %c0_i32_0 : i32
    scf.if %2 {
      %cst_12 = arith.constant 0.000000e+00 : f32
      %15 = vector.broadcast %cst_12 : f32 to vector<2x128xf32>
      %c0_13 = arith.constant 0 : index
      %c0_14 = arith.constant 0 : index
      %c0_15 = arith.constant 0 : index
      %16 = vector.load %arg5[%c0_13, %c0_14, %c0_15] : memref<1x2x128xf32, #tpu.memory_space<vmem>>, vector<1x2x128xf32>
      %17 = vector.shape_cast %16 : vector<1x2x128xf32> to vector<2x128xf32>
      %18 = vector.shape_cast %15 : vector<2x128xf32> to vector<1x2x128xf32>
      tpu.vector_store %arg5[%c0_13, %c0_14, %c0_15], %18 {strides = array<i32>} : memref<1x2x128xf32, #tpu.memory_space<vmem>>, vector<1x2x128xf32>,
    } else {
    }
    %c0 = arith.constant 0 : index
    %c0_1 = arith.constant 0 : index
    %c0_2 = arith.constant 0 : index
    %3 = vector.load %arg3[%c0, %c0_1, %c0_2] : memref<2x8x128xf32, #tpu.memory_space<vmem>>, vector<2x8x128xf32>
    %c0_3 = arith.constant 0 : index
    %c0_4 = arith.constant 0 : index
    %c0_5 = arith.constant 0 : index
    %4 = vector.load %arg4[%c0_3, %c0_4, %c0_5] : memref<2x8x128xf32, #tpu.memory_space<vmem>>, vector<2x8x128xf32>
    %5 = arith.subf %3, %4 : vector<2x8x128xf32>
    %6 = arith.mulf %5, %5 : vector<2x8x128xf32>
    %7 = arith.divf %6, %3 : vector<2x8x128xf32>
    %c0_6 = arith.constant 0 : index
    %c0_7 = arith.constant 0 : index
    %c0_8 = arith.constant 0 : index
    %8 = vector.load %arg5[%c0_6, %c0_7, %c0_8] : memref<1x2x128xf32, #tpu.memory_space<vmem>>, vector<1x2x128xf32>
    %9 = vector.shape_cast %8 : vector<1x2x128xf32> to vector<2x128xf32>
    %cst = arith.constant dense<0.000000e+00> : vector<2x128xf32>
    %10 = vector.multi_reduction <add>, %7, %cst [1] : vector<2x8x128xf32> to vector<2x128xf32>
    %11 = arith.addf %9, %10 : vector<2x128xf32>
    %c0_9 = arith.constant 0 : index
    %c0_10 = arith.constant 0 : index
    %c0_11 = arith.constant 0 : index
    %12 = vector.load %arg5[%c0_9, %c0_10, %c0_11] : memref<1x2x128xf32, #tpu.memory_space<vmem>>, vector<1x2x128xf32>
    %13 = vector.shape_cast %12 : vector<1x2x128xf32> to vector<2x128xf32>
    %14 = vector.shape_cast %11 : vector<2x128xf32> to vector<1x2x128xf32>
    tpu.vector_store %arg5[%c0_9, %c0_10, %c0_11], %14 {strides = array<i32>} : memref<1x2x128xf32, #tpu.memory_space<vmem>>, vector<1x2x128xf32>,
    return
  }
  func.func @transform_0(%arg0: i32, %arg1: i32, %arg2: i32) -> (i32, i32, i32) {
    %c1_i32 = arith.constant 1 : i32
    %0 = arith.muli %arg1, %c1_i32 : i32
    %1 = arith.addi %0, %arg2 : i32
    %c0_i32 = arith.constant 0 : i32
    %c0_i32_0 = arith.constant 0 : i32
    return %arg0, %1, %c0_i32 : i32, i32, i32
  }
  func.func @transform_1(%arg0: i32, %arg1: i32, %arg2: i32) -> (i32, i32, i32) {
    %c1_i32 = arith.constant 1 : i32
    %0 = arith.muli %arg1, %c1_i32 : i32
    %1 = arith.addi %0, %arg2 : i32
    %c0_i32 = arith.constant 0 : i32
    %c0_i32_0 = arith.constant 0 : i32
    return %arg0, %1, %c0_i32 : i32, i32, i32
  }
  func.func @transform_2(%arg0: i32, %arg1: i32, %arg2: i32) -> (i32, i32, i32) {
    %c0_i32 = arith.constant 0 : i32
    %c0_i32_0 = arith.constant 0 : i32
    return %arg1, %arg0, %c0_i32 : i32, i32, i32
  }
}

</mosaic_0001>

<llo_original>
// kernel: tpu_custom_call.1
$region0: #{tpu_custom_call.1}
  #allocation0 [shape = 'u32[]', space=smem, size = 0x4, offset = 0x4, fixed_abs, tag = 'smem constant byte address 0x4 - core index']
  #allocation1 [shape = 'u32[144,128]{1,0:T(1,128)}', space=vmem, size = 0x12000, scoped, tag = 'internal scratch']
  %s0 = inlined_call_operand.hbm [shape: f32[2,8,128], index: 0, kind: input, shape index: {}]
  %s1 = inlined_call_operand.hbm [shape: f32[2,8,128], index: 1, kind: input, shape index: {}]
  %s2 = inlined_call_operand.hbm [shape: f32[1,2,128], index: 2, kind: output, shape index: {}]
  %s3 = sld [smem:[#allocation0]]
  $region30: #{tpu_custom_call.1} parent=0
    _
  %s5 = ssub.s32 1, %s3
  %s6 = scalar_select 0, %s5, %s3
  $region1: #{tpu_custom_call.1} parent=0
    #allocation2 [shape = 'u8[8192]{0}', space=vmem, size = 0x2000, scoped, tag = 'input window, operand 0, single buffered']
    #allocation3 [shape = 's32[1]{0}', space=sflag, size = 0x4, scoped, tag = 'scoped memory for tpu_custom_call.1']
    #allocation4 [shape = 's32[1]{0}', space=sflag, size = 0x4, scoped, tag = 'scoped memory for tpu_custom_call.1']
    #allocation5 [shape = 'u8[8192]{0}', space=vmem, size = 0x2000, scoped, tag = 'input window, operand 1, single buffered']
    #allocation6 [shape = 's32[1]{0}', space=sflag, size = 0x4, scoped, tag = 'scoped memory for tpu_custom_call.1']
    #allocation7 [shape = 'u8[1024]{0}', space=vmem, size = 0x400, scoped, tag = 'output window, operand 0, single buffered']
    %7 = vsyncpa [#allocation3], 0
    %8 = vsyncpa [#allocation6], 0
    %9 = vsyncpa [#allocation4], 0
    // Predicated region
    $region2: #{tpu_custom_call.1} parent=1 // pred_check
      _
    $region3: #{tpu_custom_call.1} parent=1 // pred_check_branch
      %11 = sbr.rel (0) target = $region5
    $region4: #{tpu_custom_call.1} parent=1 // pred_region
      %s12 = sadd.s32 0, 0
      %s14 = ssub.s32 256, 256
      %15 = vsyncadd [#allocation3], %s14
      %s16 = smul.addr %s12, 128
      %s17 = scalar_lea.hbm %s0, %s16
      %s18 = sshll.u32 [#allocation2], 4
      %s19 = int_to_ptr.vmem [resolvable:$true] %s18
      %24 = dma.hbm_to_vmem [thread:$0]  %s17, 256, %s19, [#allocation3], 128, 128, 8
    $region5: #{tpu_custom_call.1} parent=1 // pred_fallthru
      _
    // Predicated region
    $region6: #{tpu_custom_call.1} parent=1 // pred_check
      _
    $region7: #{tpu_custom_call.1} parent=1 // pred_check_branch
      %26 = sbr.rel (0) target = $region9
    $region8: #{tpu_custom_call.1} parent=1 // pred_region
      %s27 = sadd.s32 0, 0
      %s29 = ssub.s32 256, 256
      %30 = vsyncadd [#allocation6], %s29
      %s31 = smul.addr %s27, 128
      %s32 = scalar_lea.hbm %s1, %s31
      %s33 = sshll.u32 [#allocation5], 4
      %s34 = int_to_ptr.vmem [resolvable:$true] %s33
      %39 = dma.hbm_to_vmem [thread:$0]  %s32, 256, %s34, [#allocation6], 128, 128, 8
    $region9: #{tpu_custom_call.1} parent=1 // pred_fallthru
      _
    // Predicated region
    $region10: #{tpu_custom_call.1} parent=1 // pred_check
      _
    $region11: #{tpu_custom_call.1} parent=1 // pred_check_branch
      %41 = sbr.rel (0) target = $region13
    $region12: #{tpu_custom_call.1} parent=1 // pred_region
      %42 = dma.done [#allocation3], 256
    $region13: #{tpu_custom_call.1} parent=1 // pred_fallthru
      _
    // Predicated region
    $region14: #{tpu_custom_call.1} parent=1 // pred_check
      _
    $region15: #{tpu_custom_call.1} parent=1 // pred_check_branch
      %44 = sbr.rel (0) target = $region17
    $region16: #{tpu_custom_call.1} parent=1 // pred_region
      %45 = dma.done [#allocation6], 256
    $region17: #{tpu_custom_call.1} parent=1 // pred_fallthru
      _
    %s46 = sadd.s32 0, 0
    %s47 = sadd.s32 0, 0
    %p48 = scmp.eq.s32.totalorder 0, 0
    // Predicated region
    $region18: #{tpu_custom_call.1} parent=1 // pred_check
      %p49 = pneg %p48
    $region19: #{tpu_custom_call.1} parent=1 // pred_check_branch
      %51 = sbr.rel (%p49) target = $region21
    $region20: #{tpu_custom_call.1} parent=1 // pred_region
      %52 = vst [vmem:[#allocation7] sm:$0x3] 0.0
    $region21: #{tpu_custom_call.1} parent=1 // pred_fallthru
      _
    %v53 = vld [vmem:[#allocation2] sm:$0xff]
    %v54 = vld [vmem:[#allocation2 + $0x8] sm:$0xff]
    %v55 = vld [vmem:[#allocation5] sm:$0xff]
    %v56 = vld [vmem:[#allocation5 + $0x8] sm:$0xff]
    %v57 = vsub.f32 %v53, %v55
    %v58 = vsub.f32 %v54, %v56
    %v59 = vmul.f32 %v57, %v57
    %v60 = vmul.f32 %v58, %v58
    %v61 = vrcp.pop %v53
    %v62 = vmul.f32 %v59, %v61
    %v63 = vrcp.pop %v54
    %v64 = vmul.f32 %v60, %v63
    %v65 = vld [vmem:[#allocation7] sm:$0x3]
    %v66 = vrot.slane %v62, 4
    %v67 = vadd.f32 %v62, %v66
    %v68 = vrot.slane %v67, 2
    %v69 = vadd.f32 %v67, %v68
    %v70 = vrot.slane %v69, 1
    %v71 = vadd.f32 %v69, %v70
    %v72 = vrot.slane %v64, 4
    %v73 = vadd.f32 %v64, %v72
    %v74 = vrot.slane %v73, 2
    %v75 = vadd.f32 %v73, %v74
    %v76 = vrot.slane %v75, 1
    %v77 = vadd.f32 %v75, %v76
    %vm80 = vcmask 1041409
    %v81 = vsel %vm80, %v77, %v71
    %v83 = vadd.f32 %v65, %v81
    %84 = vst [vmem:[#allocation7] sm:$0x3] %v83
    // Predicated region
    $region22: #{tpu_custom_call.1} parent=1 // pred_check
      _
    $region23: #{tpu_custom_call.1} parent=1 // pred_check_branch
      %86 = sbr.rel (0) target = $region25
    $region24: #{tpu_custom_call.1} parent=1 // pred_region
      %s88 = ssub.s32 32, 32
      %89 = vsyncadd [#allocation4], %s88
      %s91 = sshll.u32 [#allocation7], 4
      %s92 = int_to_ptr.vmem [resolvable:$true] %s91
      %94 = dma.vmem_to_hbm [thread:$0]  %s92, 32, %s2, [#allocation4]
    $region25: #{tpu_custom_call.1} parent=1 // pred_fallthru
      _
    // Predicated region
    $region26: #{tpu_custom_call.1} parent=1 // pred_check
      _
    $region27: #{tpu_custom_call.1} parent=1 // pred_check_branch
      %96 = sbr.rel (0) target = $region29
    $region28: #{tpu_custom_call.1} parent=1 // pred_region
      %97 = dma.done [#allocation4], 32
    $region29: #{tpu_custom_call.1} parent=1 // pred_fallthru
      _
    %98 = vsyncpa [#allocation3], 1
    %99 = vsyncpa [#allocation6], 1
    %100 = vsyncpa [#allocation4], 1

</llo_original>
